<compile_context>
chip_gen: v7x
topology: tpu7x:2x2x1
jax: 0.10.0
libtpu: 0.0.40
codegen_flags: <defaults>
</compile_context>

<pallas_src>
import functools

import jax
import jax.numpy as jnp
from jax.experimental import pallas as pl
from jax.experimental.pallas import tpu as pltpu


_SMALL_C_MAX = 128          # use the MXU one-hot gather only while its O(C^2) work is cheap
_VMEM_LIMIT_BYTES = 32 << 20
_VMEM_TILE_BUDGET = 24 << 20


def _focal_ce_tile_kernel(x_ref, t_ref, out_ref, *, n_rows, small_c):
    """One grid step: sum of per-row cross entropies over a (tile_n, C) logits tile.

    x_ref  : (tile_n, C) logits (f32 or bf16) in VMEM
    t_ref  : (1, tile_n) int32 targets (lane-dense) if small_c, else (tile_n, 1) column
    out_ref: (1, 1, 1) f32 partial CE sum for this tile
    """
    i = pl.program_id(0)
    x = x_ref[...].astype(jnp.float32)                      # (tile_n, C) f32 working copy
    tile_n, c = x.shape
    row0 = i * tile_n

    # Row-validity for the ragged last tile: padded rows may hold stale VMEM garbage.
    valid_col = (
        jax.lax.broadcasted_iota(jnp.int32, (tile_n, 1), 0) + row0
    ) < n_rows                                               # (tile_n, 1) bool

    # Zero padded rows up front (select, never multiply garbage) -> everything downstream
    # is finite; invalid rows are excluded from the sums below anyway.
    x = jnp.where(valid_col, x, 0.0)                         # (tile_n, C)

    # ---- logsumexp over the class (lane) dim --------------------------------------
    m = jnp.max(x, axis=-1, keepdims=True)                   # (tile_n, 1)  XLU max (unavoidable)
    p = jnp.exp(x - m)                                       # (tile_n, C)  EUP
    # Row-sum of exp on the otherwise-idle MXU instead of the XLU.  hi/lo bf16 split of
    # the operand keeps ~f32 accuracy even if the MXU pass rounds operands to bf16.
    ones_c = jnp.ones((c, 1), jnp.float32)
    p_hi = p.astype(jnp.bfloat16).astype(jnp.float32)
    p_lo = p - p_hi
    s = (jnp.dot(p_hi, ones_c, preferred_element_type=jnp.float32)
         + jnp.dot(p_lo, ones_c, preferred_element_type=jnp.float32))   # (tile_n, 1)
    lse = m + jnp.log(s)                                      # (tile_n, 1)  EUP log

    # ---- sum_r x[r, targets[r]] -----------------------------------------------------
    if small_c:
        # Lane-dense targets: build the TRANSPOSED one-hot (C, tile_n) with a sublane
        # broadcast (no (tile_n,1) target column, no transpose), then
        #   sum_r x[r, t_r] = trace(onehot^T @ x)
        # on the MXU, taking the diagonal with an iota==iota mask.
        t = t_ref[...]                                        # (1, tile_n) int32
        class_iota = jax.lax.broadcasted_iota(jnp.int32, (c, tile_n), 0)
        onehot_t = (class_iota == t).astype(jnp.float32)      # (C, tile_n), exact in bf16
        x_hi = x.astype(jnp.bfloat16).astype(jnp.float32)
        x_lo = x - x_hi
        g = (jnp.dot(onehot_t, x_hi, preferred_element_type=jnp.float32)
             + jnp.dot(onehot_t, x_lo, preferred_element_type=jnp.float32))   # (C, C)
        eye = (jax.lax.broadcasted_iota(jnp.int32, (c, c), 0)
               == jax.lax.broadcasted_iota(jnp.int32, (c, c), 1))
        tgt_sum = jnp.sum(jnp.where(eye, g, 0.0), keepdims=True)              # (1, 1)
    else:
        # Column targets: compare/select on the VPU + lane reduction on the XLU
        # (amortized for larger C).  Invalid rows already contribute 0 via x==0.
        t_col = t_ref[...]                                    # (tile_n, 1) int32
        col = jax.lax.broadcasted_iota(jnp.int32, (tile_n, c), 1)
        tgt_col = jnp.sum(jnp.where(col == t_col, x, 0.0), axis=-1, keepdims=True)
        tgt_sum = jnp.sum(tgt_col, keepdims=True)                              # (1, 1)

    # NOTE: like the original module (and unlike torch's ignore_index=-100), out-of-range
    # targets are not excluded; they simply gather a 0 logit.
    lse_sum = jnp.sum(jnp.where(valid_col, lse, 0.0), keepdims=True)           # (1, 1)
    out_ref[...] = (lse_sum - tgt_sum).reshape(1, 1, 1)


def _pick_tile_n(n_classes, in_itemsize, targets_lane_dense,
                 vmem_tile_budget_bytes=_VMEM_TILE_BUDGET):
    """Rows per tile from a VMEM model (all widths lane-padded to 128).

    Per row of the tile we hold:
      * 2 double-buffered input rows  : 2 * round_up(C,128) * itemsize
      * ~6 f32-wide kernel temporaries: 6 * round_up(C,128) * 4
      * targets / per-row columns     : 64 B lane-dense, ~1.1 KiB for a (tile_n,1) column
    """
    c_pad = ((n_classes + 127) // 128) * 128
    per_row = 2 * c_pad * in_itemsize + 6 * c_pad * 4
    per_row += 64 if targets_lane_dense else 1088
    rows = max(128, vmem_tile_budget_bytes // per_row)
    return int((rows // 128) * 128)


def focal_loss(inputs, targets, alpha=1.0, gamma=2, reduce=True, tile_n=None):
    """inputs: (N, C) float logits (f32 or bf16); targets: (N,) int class indices.

    Returns the scalar focal loss (reduce=True/False give the same value, as in the
    original module where F_loss is already a scalar).
    """
    N, C = inputs.shape
    itemsize = jnp.dtype(inputs.dtype).itemsize
    small_c = C <= _SMALL_C_MAX

    if tile_n is None:
        tile_n = _pick_tile_n(C, itemsize, small_c)
    tile_n = int(tile_n)
    if tile_n >= N:
        tile_n = N                                   # single full-extent tile
    else:
        # Multi-tile: 128-aligned rows satisfy the sublane rule for the logits block and
        # the lane rule for the (1, tile_n) targets block (and bf16/int8 sublane packing).
        tile_n = max(128, (tile_n // 128) * 128)
        if tile_n >= N:
            tile_n = N
    num_tiles = pl.cdiv(N, tile_n)

    if small_c:
        t_arr = targets.astype(jnp.int32).reshape(1, N)            # lane-dense targets
        t_spec = pl.BlockSpec((1, tile_n), lambda i: (0, i))
    else:
        t_arr = targets.astype(jnp.int32).reshape(N, 1)            # column targets
        t_spec = pl.BlockSpec((tile_n, 1), lambda i: (i, 0))

    kernel = functools.partial(_focal_ce_tile_kernel, n_rows=N, small_c=small_c)

    # Advisory hint for XLA's scheduler (kernel is mem-/EUP-bound; MXU work is filler).
    cost = pl.CostEstimate(
        flops=4 * N * C * ((C if small_c else 1) + 4),
        transcendentals=N * C + 2 * N,
        bytes_accessed=N * C * itemsize + N * 4 + num_tiles * 4,
    )

    partial_ce = pl.pallas_call(
        kernel,
        out_shape=jax.ShapeDtypeStruct((num_tiles, 1, 1), jnp.float32),
        grid_spec=pltpu.PrefetchScalarGridSpec(
            num_scalar_prefetch=0,
            grid=(num_tiles,),
            in_specs=[
                pl.BlockSpec((tile_n, C), lambda i: (i, 0)),   # logits tile (C full-extent)
                t_spec,                                        # targets tile
            ],
            out_specs=pl.BlockSpec((1, 1, 1), lambda i: (i, 0, 0)),
        ),
        compiler_params=pltpu.CompilerParams(
            dimension_semantics=("parallel",),                 # independent tiles -> both TCs on v7x
            vmem_limit_bytes=_VMEM_LIMIT_BYTES,
        ),
        cost_estimate=cost,
    )(inputs, t_arr)

    # Tiny epilogue in plain JAX: mean CE over exactly N rows + focal transform.
    ce = jnp.sum(partial_ce) / jnp.float32(N)
    pt = jnp.exp(-ce)
    one_minus_pt = jnp.maximum(1.0 - pt, 0.0)       # guard fractional-gamma NaN when ce ~ 0
    f_loss = jnp.float32(alpha) * (one_minus_pt ** gamma) * ce
    # reduce=True -> mean of a scalar == the scalar; reduce=False returns the same scalar.
    return f_loss


def _focal_loss_ref(inputs, targets, alpha=1.0, gamma=2):
    x = inputs.astype(jnp.float32)
    lse = jax.nn.logsumexp(x, axis=-1)
    tgt = jnp.take_along_axis(x, targets[:, None].astype(jnp.int32), axis=-1)[:, 0]
    ce = jnp.mean(lse - tgt)
    pt = jnp.exp(-ce)
    return alpha * (1.0 - pt) ** gamma * ce


if __name__ == "__main__":
    key = jax.random.PRNGKey(0)
    k1, k2, k3, k4, k5, k6 = jax.random.split(key, 6)

    # 1) Small single-tile case (typical classifier-head shape; small-C / MXU-gather path).
    N1, C1 = 20, 32
    x1 = jax.random.normal(k1, (N1, C1), dtype=jnp.float32)
    t1 = jax.random.randint(k2, (N1,), 0, C1, dtype=jnp.int32)
    out1 = jax.block_until_ready(focal_loss(x1, t1, alpha=1.0, gamma=2, reduce=True))
    ref1 = _focal_loss_ref(x1, t1, alpha=1.0, gamma=2)
    assert jnp.allclose(out1, ref1, rtol=1e-4, atol=1e-4), (out1, ref1)

    # 2) Multi-tile with a ragged last tile (small-C path, per-tile partial-sum masking).
    N2, C2 = 300, 32
    x2 = jax.random.normal(k3, (N2, C2), dtype=jnp.float32)
    t2 = jax.random.randint(k4, (N2,), 0, C2, dtype=jnp.int32)
    out2 = jax.block_until_ready(focal_loss(x2, t2, alpha=1.0, gamma=2, tile_n=128))
    ref2 = _focal_loss_ref(x2, t2, alpha=1.0, gamma=2)
    assert jnp.allclose(out2, ref2, rtol=1e-4, atol=1e-4), (out2, ref2)

    # 3) Larger class count (column-targets / XLU-gather path), ragged multi-tile.
    N3, C3 = 300, 512
    x3 = jax.random.normal(k5, (N3, C3), dtype=jnp.float32)
    t3 = jax.random.randint(k6, (N3,), 0, C3, dtype=jnp.int32)
    out3 = jax.block_until_ready(focal_loss(x3, t3, alpha=0.5, gamma=2, tile_n=128))
    ref3 = _focal_loss_ref(x3, t3, alpha=0.5, gamma=2)
    assert jnp.allclose(out3, ref3, rtol=1e-4, atol=1e-4), (out3, ref3)

    print("KERNEL_OK")
</pallas_src>

<mosaic_0001>
module attributes {stable_mosaic.version = 11 : i64} {
  func.func @_focal_ce_tile_kernel(%arg0: i32, %arg1: memref<20x32xf32, #tpu.memory_space<vmem>>, %arg2: memref<1x20xi32, #tpu.memory_space<vmem>>, %arg3: memref<1x1x1xf32, #tpu.memory_space<vmem>>) attributes {dimension_semantics = [#tpu.dimension_semantics<parallel>], iteration_bounds = array<i64: 1>, scalar_prefetch = 0 : i64, scratch_operands = 0 : i64, tpu.core_type = #tpu.core_type<tc>, window_params = [{transform_indices = @transform_0, window_bounds = array<i64: 20, 32>}, {transform_indices = @transform_1, window_bounds = array<i64: 1, 20>}, {transform_indices = @transform_2, window_bounds = array<i64: 1, 1, 1>}]} {
    %c0 = arith.constant 0 : index
    %c0_0 = arith.constant 0 : index
    %0 = vector.load %arg1[%c0, %c0_0] : memref<20x32xf32, #tpu.memory_space<vmem>>, vector<20x32xf32>
    %c20_i32 = arith.constant 20 : i32
    %1 = arith.muli %arg0, %c20_i32 : i32
    %2 = tpu.iota {dimensions = array<i32: 0>} : vector<20x1xi32>
    %3 = vector.broadcast %1 : i32 to vector<20x1xi32>
    %4 = arith.addi %2, %3 : vector<20x1xi32>
    %c20_i32_1 = arith.constant 20 : i32
    %5 = vector.broadcast %c20_i32_1 : i32 to vector<20x1xi32>
    %6 = arith.cmpi slt, %4, %5 : vector<20x1xi32>
    %cst = arith.constant 0.000000e+00 : f32
    %7 = vector.shape_cast %6 : vector<20x1xi1> to vector<20x1xi1>
    %8 = vector.broadcast %7 : vector<20x1xi1> to vector<20x32xi1>
    %9 = vector.broadcast %cst : f32 to vector<20x32xf32>
    %10 = arith.select %8, %0, %9 : vector<20x32xi1>, vector<20x32xf32>
    %cst_2 = arith.constant dense<0xFF800000> : vector<20xf32>
    %11 = vector.multi_reduction <maximumf>, %10, %cst_2 [1] : vector<20x32xf32> to vector<20xf32>
    %12 = vector.shape_cast %11 : vector<20xf32> to vector<20x1xf32>
    %13 = vector.broadcast %12 : vector<20x1xf32> to vector<20x32xf32>
    %14 = arith.subf %10, %13 : vector<20x32xf32>
    %15 = math.exp %14 : vector<20x32xf32>
    %cst_3 = arith.constant 1.000000e+00 : f32
    %16 = vector.broadcast %cst_3 : f32 to vector<32x1xf32>
    %17 = arith.truncf %15 : vector<20x32xf32> to vector<20x32xbf16>
    %18 = arith.extf %17 : vector<20x32xbf16> to vector<20x32xf32>
    %19 = arith.subf %15, %18 : vector<20x32xf32>
    %cst_4 = arith.constant dense<0.000000e+00> : vector<20x1xf32>
    %20 = tpu.matmul %18, %16, %cst_4 {dimension_numbers = #tpu.dot_dimension_numbers<[1], [0], [0], [1], [0, 0, 1, 1], [], []>} : vector<20x32xf32>, vector<32x1xf32>, vector<20x1xf32> -> vector<20x1xf32>
    %cst_5 = arith.constant dense<0.000000e+00> : vector<20x1xf32>
    %21 = tpu.matmul %19, %16, %cst_5 {dimension_numbers = #tpu.dot_dimension_numbers<[1], [0], [0], [1], [0, 0, 1, 1], [], []>} : vector<20x32xf32>, vector<32x1xf32>, vector<20x1xf32> -> vector<20x1xf32>
    %22 = arith.addf %20, %21 : vector<20x1xf32>
    %23 = math.log %22 : vector<20x1xf32>
    %24 = arith.addf %12, %23 : vector<20x1xf32>
    %c0_6 = arith.constant 0 : index
    %c0_7 = arith.constant 0 : index
    %25 = vector.load %arg2[%c0_6, %c0_7] : memref<1x20xi32, #tpu.memory_space<vmem>>, vector<1x20xi32>
    %26 = tpu.iota {dimensions = array<i32: 0>} : vector<32x20xi32>
    %27 = vector.broadcast %25 : vector<1x20xi32> to vector<32x20xi32>
    %28 = arith.cmpi eq, %26, %27 : vector<32x20xi32>
    %29 = arith.extui %28 : vector<32x20xi1> to vector<32x20xi32>
    %30 = arith.sitofp %29 : vector<32x20xi32> to vector<32x20xf32>
    %31 = arith.truncf %10 : vector<20x32xf32> to vector<20x32xbf16>
    %32 = arith.extf %31 : vector<20x32xbf16> to vector<20x32xf32>
    %33 = arith.subf %10, %32 : vector<20x32xf32>
    %cst_8 = arith.constant dense<0.000000e+00> : vector<32x32xf32>
    %34 = tpu.matmul %30, %32, %cst_8 {dimension_numbers = #tpu.dot_dimension_numbers<[1], [0], [0], [1], [0, 0, 1, 1], [], []>} : vector<32x20xf32>, vector<20x32xf32>, vector<32x32xf32> -> vector<32x32xf32>
    %cst_9 = arith.constant dense<0.000000e+00> : vector<32x32xf32>
    %35 = tpu.matmul %30, %33, %cst_9 {dimension_numbers = #tpu.dot_dimension_numbers<[1], [0], [0], [1], [0, 0, 1, 1], [], []>} : vector<32x20xf32>, vector<20x32xf32>, vector<32x32xf32> -> vector<32x32xf32>
    %36 = arith.addf %34, %35 : vector<32x32xf32>
    %37 = tpu.iota {dimensions = array<i32: 0>} : vector<32x32xi32>
    %38 = tpu.iota {dimensions = array<i32: 1>} : vector<32x32xi32>
    %39 = arith.cmpi eq, %37, %38 : vector<32x32xi32>
    %cst_10 = arith.constant 0.000000e+00 : f32
    %40 = vector.broadcast %cst_10 : f32 to vector<32x32xf32>
    %41 = arith.select %39, %36, %40 : vector<32x32xi1>, vector<32x32xf32>
    %42 = vector.shape_cast %41 : vector<32x32xf32> to vector<1x32x32xf32>
    %cst_11 = arith.constant dense<0.000000e+00> : vector<1xf32>
    %43 = vector.multi_reduction <add>, %42, %cst_11 [1, 2] : vector<1x32x32xf32> to vector<1xf32>
    %44 = vector.shape_cast %43 : vector<1xf32> to vector<1x1x1xf32>
    %45 = vector.extract %44[0, 0, 0] : f32 from vector<1x1x1xf32>
    %46 = vector.broadcast %45 : f32 to vector<1x1xf32>
    %cst_12 = arith.constant 0.000000e+00 : f32
    %47 = vector.broadcast %cst_12 : f32 to vector<20x1xf32>
    %48 = arith.select %6, %24, %47 : vector<20x1xi1>, vector<20x1xf32>
    %49 = vector.shape_cast %48 : vector<20x1xf32> to vector<1x20x1xf32>
    %cst_13 = arith.constant dense<0.000000e+00> : vector<1xf32>
    %50 = vector.multi_reduction <add>, %49, %cst_13 [1, 2] : vector<1x20x1xf32> to vector<1xf32>
    %51 = vector.shape_cast %50 : vector<1xf32> to vector<1x1x1xf32>
    %52 = vector.extract %51[0, 0, 0] : f32 from vector<1x1x1xf32>
    %53 = vector.broadcast %52 : f32 to vector<1x1xf32>
    %54 = arith.subf %53, %46 : vector<1x1xf32>
    %55 = vector.shape_cast %54 : vector<1x1xf32> to vector<1x1x1xf32>
    %c0_14 = arith.constant 0 : index
    %c0_15 = arith.constant 0 : index
    %c0_16 = arith.constant 0 : index
    %56 = vector.load %arg3[%c0_14, %c0_15, %c0_16] : memref<1x1x1xf32, #tpu.memory_space<vmem>>, vector<1x1x1xf32>
    tpu.vector_store %arg3[%c0_14, %c0_15, %c0_16], %55 {strides = array<i32>} : memref<1x1x1xf32, #tpu.memory_space<vmem>>, vector<1x1x1xf32>,
    return
  }
  func.func @transform_0(%arg0: i32) -> (i32, i32) {
    %c0_i32 = arith.constant 0 : i32
    %c0_i32_0 = arith.constant 0 : i32
    return %arg0, %c0_i32 : i32, i32
  }
  func.func @transform_1(%arg0: i32) -> (i32, i32) {
    %c0_i32 = arith.constant 0 : i32
    %c0_i32_0 = arith.constant 0 : i32
    return %c0_i32, %arg0 : i32, i32
  }
  func.func @transform_2(%arg0: i32) -> (i32, i32, i32) {
    %c0_i32 = arith.constant 0 : i32
    %c0_i32_0 = arith.constant 0 : i32
    %c0_i32_1 = arith.constant 0 : i32
    return %arg0, %c0_i32, %c0_i32_0 : i32, i32, i32
  }
}

</mosaic_0001>

<llo_original>
// kernel: tpu_custom_call.1
$region0: #{tpu_custom_call.1}
  #allocation0 [shape = 'u32[]', space=smem, size = 0x4, offset = 0x4, fixed_abs, tag = 'smem constant byte address 0x4 - core index']
  #allocation1 [shape = 'u32[144,128]{1,0:T(1,128)}', space=vmem, size = 0x12000, scoped, tag = 'internal scratch']
  %s0 = inlined_call_operand.hbm [shape: f32[20,32], index: 0, kind: input, shape index: {}]
  %s1 = inlined_call_operand.vmem [shape: s32[1,20], index: 1, kind: input, shape index: {}]
  %s2 = inlined_call_operand.hbm [shape: f32[1,1,1], index: 2, kind: output, shape index: {}]
  %s3 = sld [smem:[#allocation0]]
  $region22: #{tpu_custom_call.1} parent=0
    _
  %s5 = ssub.s32 1, %s3
  %s6 = scalar_select 0, %s5, %s3
  $region1: #{tpu_custom_call.1} parent=0
    #allocation2 [shape = 'u8[12288]{0}', space=vmem, size = 0x3000, scoped, tag = 'input window, operand 0, single buffered']
    #allocation3 [shape = 's32[1]{0}', space=sflag, size = 0x4, scoped, tag = 'scoped memory for tpu_custom_call.1']
    #allocation4 [shape = 's32[1]{0}', space=sflag, size = 0x4, scoped, tag = 'scoped memory for tpu_custom_call.1']
    #allocation5 [shape = 'u8[512]{0}', space=vmem, size = 0x400, scoped, tag = 'output window, operand 0, single buffered']
    %7 = vsyncpa [#allocation3], 0
    %8 = vsyncpa [#allocation4], 0
    // Predicated region
    $region2: #{tpu_custom_call.1} parent=1 // pred_check
      _
    $region3: #{tpu_custom_call.1} parent=1 // pred_check_branch
      %10 = sbr.rel (0) target = $region5
    $region4: #{tpu_custom_call.1} parent=1 // pred_region
      %s12 = ssub.s32 384, 384
      %13 = vsyncadd [#allocation3], %s12
      %s14 = sshll.u32 [#allocation2], 4
      %s15 = int_to_ptr.vmem [resolvable:$true] %s14
      %20 = dma.hbm_to_vmem [thread:$0]  %s0, 384, %s15, [#allocation3], 128, 128, 8
    $region5: #{tpu_custom_call.1} parent=1 // pred_fallthru
      _
    // Predicated region
    $region6: #{tpu_custom_call.1} parent=1 // pred_check
      _
    $region7: #{tpu_custom_call.1} parent=1 // pred_check_branch
      %22 = sbr.rel (0) target = $region9
    $region8: #{tpu_custom_call.1} parent=1 // pred_region
      _
    $region9: #{tpu_custom_call.1} parent=1 // pred_fallthru
      _
    // Predicated region
    $region10: #{tpu_custom_call.1} parent=1 // pred_check
      _
    $region11: #{tpu_custom_call.1} parent=1 // pred_check_branch
      %24 = sbr.rel (0) target = $region13
    $region12: #{tpu_custom_call.1} parent=1 // pred_region
      %25 = dma.done [#allocation3], 384
    $region13: #{tpu_custom_call.1} parent=1 // pred_fallthru
      _
    %v26 = vld [vmem:[#allocation2] sm:$0xff]
    %v27 = vld [vmem:[#allocation2 + $0x8] sm:$0xff]
    %v28 = vld [vmem:[#allocation2 + $0x10] sm:$0xf]
    %s29 = smul.u32 0, 20
    %v30 = vlaneseq
    %v31 = vshrl.u32 %v30, 7
    %v32 = vadd.s32 %v31, 8
    %v33 = vadd.s32 %v31, 16
    %v34 = vstv %s29
    %v35 = vadd.s32 %v31, %v34
    %v36 = vadd.s32 %v32, %v34
    %v37 = vadd.s32 %v33, %v34
    %vm38 = vcmp.lt.s32.totalorder %v35, 20
    %vm39 = vcmp.lt.s32.totalorder %v36, 20
    %vm40 = vcmp.lt.s32.totalorder %v37, 20
    %v41 = vsel %vm38, 1, 0
    %v42 = vsel %vm39, 1, 0
    %v43 = vsel %vm40, 1, 0
    %vm44 = vcmp.eq.s32.totalorder %v41, 1
    %vm45 = vcmp.eq.s32.totalorder %v42, 1
    %vm46 = vcmp.eq.s32.totalorder %v43, 1
    %v47 = vsel %vm44, %v26, 0.0
    %v48 = vsel %vm45, %v27, 0.0
    %v49 = vsel %vm46, %v28, 0.0
    %vm50 = vcmask 261120
    %v51 = vsel %vm50, %v47, -inf
    %52 = vmax.xlane.f32.xlu0 %v51
    %v53 = vpop.xlane.xlu0 %52
    %v54 = vsel %vm50, %v48, -inf
    %55 = vmax.xlane.f32.xlu0 %v54
    %v56 = vpop.xlane.xlu0 %55
    %vm57 = vcmask 257024
    %v58 = vsel %vm57, %v49, -inf
    %59 = vmax.xlane.f32.xlu0 %v58
    %v60 = vpop.xlane.xlu0 %59
    %v61 = vsub.f32 %v47, %v53
    %v62 = vsub.f32 %v48, %v56
    %v63 = vsub.f32 %v49, %v60
    %v64 = vmul.f32 %v61, 1.442695
    %v65 = vpow.pop %v64
    %v66 = vmul.f32 %v62, 1.442695
    %v67 = vpow.pop %v66
    %v68 = vmul.f32 %v63, 1.442695
    %v69 = vpow.pop %v68
    %v70 = vpack.c.bf16 %v67, %v65
    %v71 = vpack.c.bf16 %v69, %v69
    %v72 = vunpack.c.l.bf16 %v70
    %v73 = vunpack.c.h.bf16 %v70
    %v74 = vunpack.c.l.bf16 %v71
    %v75 = vsub.f32 %v65, %v72
    %v76 = vsub.f32 %v67, %v73
    %v77 = vsub.f32 %v69, %v74
    %v79 = vsel %vm50, %v75, 0
    %v82 = vsel %vm50, %v76, 0
    %v85 = vsel %vm50, %v77, 0
    %87 = vmatprep.subr.mxu0 0.0
    %88 = vmatpush1.msra.mxu0 1.0
    %89 = vmatprep.subr.mxu0 0.0
    %90 = vmatpush1.msra.mxu0 1.0
    %91 = vmatprep.subr.mxu0 0.0
    %92 = vmatpush1.msra.mxu0 1.0
    %93 = vmatprep.subr.mxu0 0.0
    %94 = vmatpush1.msra.mxu0 1.0
    %95 = vmatprep.subr.mxu0 0.0
    %96 = vmatpush1.msra.mxu0 0.0
    %97 = vmatprep.subr.mxu0 0.0
    %98 = vmatpush1.msra.mxu0 0.0
    %99 = vmatprep.subr.mxu0 0.0
    %100 = vmatpush1.msra.mxu0 0.0
    %101 = vmatprep.subr.mxu0 0.0
    %102 = vmatpush1.msra.mxu0 0.0
    %103 = vmatprep.subr.mxu0 0.0
    %104 = vmatpush1.msra.mxu0 0.0
    %105 = vmatprep.subr.mxu0 0.0
    %106 = vmatpush1.msra.mxu0 0.0
    %107 = vmatprep.subr.mxu0 0.0
    %108 = vmatpush1.msra.mxu0 0.0
    %109 = vmatprep.subr.mxu0 0.0
    %110 = vmatpush1.msra.mxu0 0.0
    %111 = vmatprep.subr.mxu0 0.0
    %112 = vmatpush1.msra.mxu0 0.0
    %113 = vmatprep.subr.mxu0 0.0
    %114 = vmatpush1.msra.mxu0 0.0
    %115 = vmatprep.subr.mxu0 0.0
    %116 = vmatpush1.msra.mxu0 0.0
    %117 = vmatprep.subr.mxu0 0.0
    %118 = vmatpush1.msra.mxu0 0.0
    %119 = vmatprep.subr.mxu0 0.0
    %120 = vmatpush1.msra.mxu0 0.0
    %121 = vmatprep.subr.mxu0 0.0
    %122 = vmatpush1.msra.mxu0 0.0
    %123 = vmatprep.subr.mxu0 0.0
    %124 = vmatpush1.msra.mxu0 0.0
    %125 = vmatprep.subr.mxu0 0.0
    %126 = vmatpush1.msra.mxu0 0.0
    %127 = vmatprep.subr.mxu0 0.0
    %128 = vmatpush1.msra.mxu0 0.0
    %129 = vmatprep.subr.mxu0 0.0
    %130 = vmatpush1.msra.mxu0 0.0
    %131 = vmatprep.subr.mxu0 0.0
    %132 = vmatpush1.msra.mxu0 0.0
    %133 = vmatprep.subr.mxu0 0.0
    %134 = vmatpush1.msra.mxu0 0.0
    %135 = vmatprep.subr.mxu0 0.0
    %136 = vmatpush1.msra.mxu0 0.0
    %137 = vmatprep.subr.mxu0 0.0
    %138 = vmatpush1.msra.mxu0 0.0
    %139 = vmatprep.subr.mxu0 0.0
    %140 = vmatpush1.msra.mxu0 0.0
    %141 = vmatprep.subr.mxu0 0.0
    %142 = vmatpush1.msra.mxu0 0.0
    %143 = vmatprep.subr.mxu0 0.0
    %144 = vmatpush1.msra.mxu0 0.0
    %145 = vmatprep.subr.mxu0 0.0
    %146 = vmatpush1.msra.mxu0 0.0
    %147 = vmatprep.subr.mxu0 0.0
    %148 = vmatpush1.msra.mxu0 0.0
    %149 = vmatprep.subr.mxu0 0.0
    %150 = vmatpush1.msra.mxu0 0.0
    %151 = vmatprep.mubr.f32.mxu0 0.0
    %152 = vmatmul.mubr.f32.gmra.mrb[0].mxu0 %v79
    %v153 = vpop.f32.mrb[0].mxu0
    %v154 = vadd.f32 0.0, %v153
    %v155 = vpop.f32.mrb[0].mxu0
    %156 = vmatprep.mubr.f32.mxu0 0.0
    %157 = vmatmul.mubr.f32.gmra.mrb[0].mxu0 %v82
    %v158 = vpop.f32.mrb[0].mxu0
    %v159 = vadd.f32 0.0, %v158
    %v160 = vpop.f32.mrb[0].mxu0
    %161 = vmatprep.mubr.f32.mxu0 0.0
    %162 = vmatmul.mubr.f32.gmra.mrb[0].mxu0 %v85
    %v163 = vpop.f32.mrb[0].mxu0
    %v164 = vadd.f32 0.0, %v163
    %v165 = vpop.f32.mrb[0].mxu0
    %166 = vdwg.mxu0
    %v168 = vsel %vm50, %v72, 0
    %v171 = vsel %vm50, %v73, 0
    %v174 = vsel %vm50, %v74, 0
    %176 = vmatprep.subr.mxu0 0.0
    %177 = vmatpush1.msra.mxu0 1.0
    %178 = vmatprep.subr.mxu0 0.0
    %179 = vmatpush1.msra.mxu0 1.0
    %180 = vmatprep.subr.mxu0 0.0
    %181 = vmatpush1.msra.mxu0 1.0
    %182 = vmatprep.subr.mxu0 0.0
    %183 = vmatpush1.msra.mxu0 1.0
    %184 = vmatprep.subr.mxu0 0.0
    %185 = vmatpush1.msra.mxu0 0.0
    %186 = vmatprep.subr.mxu0 0.0
    %187 = vmatpush1.msra.mxu0 0.0
    %188 = vmatprep.subr.mxu0 0.0
    %189 = vmatpush1.msra.mxu0 0.0
    %190 = vmatprep.subr.mxu0 0.0
    %191 = vmatpush1.msra.mxu0 0.0
    %192 = vmatprep.subr.mxu0 0.0
    %193 = vmatpush1.msra.mxu0 0.0
    %194 = vmatprep.subr.mxu0 0.0
    %195 = vmatpush1.msra.mxu0 0.0
    %196 = vmatprep.subr.mxu0 0.0
    %197 = vmatpush1.msra.mxu0 0.0
    %198 = vmatprep.subr.mxu0 0.0
    %199 = vmatpush1.msra.mxu0 0.0
    %200 = vmatprep.subr.mxu0 0.0
    %201 = vmatpush1.msra.mxu0 0.0
    %202 = vmatprep.subr.mxu0 0.0
    %203 = vmatpush1.msra.mxu0 0.0
    %204 = vmatprep.subr.mxu0 0.0
    %205 = vmatpush1.msra.mxu0 0.0
    %206 = vmatprep.subr.mxu0 0.0
    %207 = vmatpush1.msra.mxu0 0.0
    %208 = vmatprep.subr.mxu0 0.0
    %209 = vmatpush1.msra.mxu0 0.0
    %210 = vmatprep.subr.mxu0 0.0
    %211 = vmatpush1.msra.mxu0 0.0
    %212 = vmatprep.subr.mxu0 0.0
    %213 = vmatpush1.msra.mxu0 0.0
    %214 = vmatprep.subr.mxu0 0.0
    %215 = vmatpush1.msra.mxu0 0.0
    %216 = vmatprep.subr.mxu0 0.0
    %217 = vmatpush1.msra.mxu0 0.0
    %218 = vmatprep.subr.mxu0 0.0
    %219 = vmatpush1.msra.mxu0 0.0
    %220 = vmatprep.subr.mxu0 0.0
    %221 = vmatpush1.msra.mxu0 0.0
    %222 = vmatprep.subr.mxu0 0.0
    %223 = vmatpush1.msra.mxu0 0.0
    %224 = vmatprep.subr.mxu0 0.0
    %225 = vmatpush1.msra.mxu0 0.0
    %226 = vmatprep.subr.mxu0 0.0
    %227 = vmatpush1.msra.mxu0 0.0
    %228 = vmatprep.subr.mxu0 0.0
    %229 = vmatpush1.msra.mxu0 0.0
    %230 = vmatprep.subr.mxu0 0.0
    %231 = vmatpush1.msra.mxu0 0.0
    %232 = vmatprep.subr.mxu0 0.0
    %233 = vmatpush1.msra.mxu0 0.0
    %234 = vmatprep.subr.mxu0 0.0
    %235 = vmatpush1.msra.mxu0 0.0
    %236 = vmatprep.subr.mxu0 0.0
    %237 = vmatpush1.msra.mxu0 0.0
    %238 = vmatprep.subr.mxu0 0.0
    %239 = vmatpush1.msra.mxu0 0.0
    %240 = vmatprep.mubr.f32.mxu0 0.0
    %241 = vmatmul.mubr.f32.gmra.mrb[0].mxu0 %v168
    %v242 = vpop.f32.mrb[0].mxu0
    %v243 = vadd.f32 %v154, %v242
    %v244 = vpop.f32.mrb[0].mxu0
    %245 = vmatprep.mubr.f32.mxu0 0.0
    %246 = vmatmul.mubr.f32.gmra.mrb[0].mxu0 %v171
    %v247 = vpop.f32.mrb[0].mxu0
    %v248 = vadd.f32 %v159, %v247
    %v249 = vpop.f32.mrb[0].mxu0
    %250 = vmatprep.mubr.f32.mxu0 0.0
    %251 = vmatmul.mubr.f32.gmra.mrb[0].mxu0 %v174
    %v252 = vpop.f32.mrb[0].mxu0
    %v253 = vadd.f32 %v164, %v252
    %v254 = vpop.f32.mrb[0].mxu0
    %255 = vdwg.mxu0
    %v256 = vlog2.pop %v243
    %v257 = vmul.f32 %v256, 0.6931472
    %v258 = vlog2.pop %v248
    %v259 = vmul.f32 %v258, 0.6931472
    %v260 = vlog2.pop %v253
    %v261 = vmul.f32 %v260, 0.6931472
    %v262 = vadd.f32 %v53, %v257
    %v263 = vadd.f32 %v56, %v259
    %v264 = vadd.f32 %v60, %v261
    %v265 = vld [vmem:[%s1] sm:$0x1]
    %v266 = vadd.s32 %v31, 24
    %v267 = vlaneseq
    %v268 = vshrl.u32 %v267, 7
    %v269 = vsub.s32 0, %v268
    %v270 = vrot.slane %v265, %v269
    %vm271 = vcmp.eq.s32.totalorder %v31, %v270
    %vm272 = vcmp.eq.s32.totalorder %v32, %v270
    %vm273 = vcmp.eq.s32.totalorder %v33, %v270
    %vm274 = vcmp.eq.s32.totalorder %v266, %v270
    %v275 = vsel %vm271, 1, 0
    %v276 = vsel %vm272, 1, 0
    %v277 = vsel %vm273, 1, 0
    %v278 = vsel %vm274, 1, 0
    %v279 = vcvt.s32.f32 %v275
    %v280 = vcvt.s32.f32 %v276
    %v281 = vcvt.s32.f32 %v277
    %v282 = vcvt.s32.f32 %v278
    %v283 = vpack.c.bf16 %v48, %v47
    %v284 = vpack.c.bf16 %v49, %v49
    %v285 = vunpack.c.l.bf16 %v283
    %v286 = vunpack.c.h.bf16 %v283
    %v287 = vunpack.c.l.bf16 %v284
    %v288 = vsub.f32 %v47, %v285
    %v289 = vsub.f32 %v48, %v286
    %v290 = vsub.f32 %v49, %v287
    %vm291 = vcmask 162816
    %v293 = vsel %vm291, %v279, 0
    %v296 = vsel %vm291, %v280, 0
    %v299 = vsel %vm291, %v281, 0
    %v302 = vsel %vm291, %v282, 0
    %vm304 = vcmask 1043456
    %v306 = vsel %vm304, %v290, 0
    %308 = vmatprep.subr.mxu0 0.0
    %309 = vmatpush1.msra.mxu0 %v288
    %310 = vmatprep.subr.mxu0 0.0
    %311 = vmatpush1.msra.mxu0 %v289
    %312 = vmatprep.subr.mxu0 0.0
    %313 = vmatpush1.msra.mxu0 %v306
    %314 = vmatprep.subr.mxu0 0.0
    %315 = vmatpush1.msra.mxu0 0.0
    %316 = vmatprep.subr.mxu0 0.0
    %317 = vmatpush1.msra.mxu0 0.0
    %318 = vmatprep.subr.mxu0 0.0
    %319 = vmatpush1.msra.mxu0 0.0
    %320 = vmatprep.subr.mxu0 0.0
    %321 = vmatpush1.msra.mxu0 0.0
    %322 = vmatprep.subr.mxu0 0.0
    %323 = vmatpush1.msra.mxu0 0.0
    %324 = vmatprep.subr.mxu0 0.0
    %325 = vmatpush1.msra.mxu0 0.0
    %326 = vmatprep.subr.mxu0 0.0
    %327 = vmatpush1.msra.mxu0 0.0
    %328 = vmatprep.subr.mxu0 0.0
    %329 = vmatpush1.msra.mxu0 0.0
    %330 = vmatprep.subr.mxu0 0.0
    %331 = vmatpush1.msra.mxu0 0.0
    %332 = vmatprep.subr.mxu0 0.0
    %333 = vmatpush1.msra.mxu0 0.0
    %334 = vmatprep.subr.mxu0 0.0
    %335 = vmatpush1.msra.mxu0 0.0
    %336 = vmatprep.subr.mxu0 0.0
    %337 = vmatpush1.msra.mxu0 0.0
    %338 = vmatprep.subr.mxu0 0.0
    %339 = vmatpush1.msra.mxu0 0.0
    %340 = vmatprep.subr.mxu0 0.0
    %341 = vmatpush1.msra.mxu0 0.0
    %342 = vmatprep.subr.mxu0 0.0
    %343 = vmatpush1.msra.mxu0 0.0
    %344 = vmatprep.subr.mxu0 0.0
    %345 = vmatpush1.msra.mxu0 0.0
    %346 = vmatprep.subr.mxu0 0.0
    %347 = vmatpush1.msra.mxu0 0.0
    %348 = vmatprep.subr.mxu0 0.0
    %349 = vmatpush1.msra.mxu0 0.0
    %350 = vmatprep.subr.mxu0 0.0
    %351 = vmatpush1.msra.mxu0 0.0
    %352 = vmatprep.subr.mxu0 0.0
    %353 = vmatpush1.msra.mxu0 0.0
    %354 = vmatprep.subr.mxu0 0.0
    %355 = vmatpush1.msra.mxu0 0.0
    %356 = vmatprep.subr.mxu0 0.0
    %357 = vmatpush1.msra.mxu0 0.0
    %358 = vmatprep.subr.mxu0 0.0
    %359 = vmatpush1.msra.mxu0 0.0
    %360 = vmatprep.subr.mxu0 0.0
    %361 = vmatpush1.msra.mxu0 0.0
    %362 = vmatprep.subr.mxu0 0.0
    %363 = vmatpush1.msra.mxu0 0.0
    %364 = vmatprep.subr.mxu0 0.0
    %365 = vmatpush1.msra.mxu0 0.0
    %366 = vmatprep.subr.mxu0 0.0
    %367 = vmatpush1.msra.mxu0 0.0
    %368 = vmatprep.subr.mxu0 0.0
    %369 = vmatpush1.msra.mxu0 0.0
    %370 = vmatprep.subr.mxu0 0.0
    %371 = vmatpush1.msra.mxu0 0.0
    %372 = vmatprep.mubr.f32.mxu0 0.0
    %373 = vmatmul.mubr.f32.gmra.mrb[0].mxu0 %v293
    %v374 = vpop.f32.mrb[0].mxu0
    %v375 = vadd.f32 0.0, %v374
    %v376 = vpop.f32.mrb[0].mxu0
    %377 = vmatprep.mubr.f32.mxu0 0.0
    %378 = vmatmul.mubr.f32.gmra.mrb[0].mxu0 %v296
    %v379 = vpop.f32.mrb[0].mxu0
    %v380 = vadd.f32 0.0, %v379
    %v381 = vpop.f32.mrb[0].mxu0
    %382 = vmatprep.mubr.f32.mxu0 0.0
    %383 = vmatmul.mubr.f32.gmra.mrb[0].mxu0 %v299
    %v384 = vpop.f32.mrb[0].mxu0
    %v385 = vadd.f32 0.0, %v384
    %v386 = vpop.f32.mrb[0].mxu0
    %387 = vmatprep.mubr.f32.mxu0 0.0
    %388 = vmatmul.mubr.f32.gmra.mrb[0].mxu0 %v302
    %v389 = vpop.f32.mrb[0].mxu0
    %v390 = vadd.f32 0.0, %v389
    %v391 = vpop.f32.mrb[0].mxu0
    %392 = vdwg.mxu0
    %v394 = vsel %vm304, %v287, 0
    %396 = vmatprep.subr.mxu0 0.0
    %397 = vmatpush1.msra.mxu0 %v285
    %398 = vmatprep.subr.mxu0 0.0
    %399 = vmatpush1.msra.mxu0 %v286
    %400 = vmatprep.subr.mxu0 0.0
    %401 = vmatpush1.msra.mxu0 %v394
    %402 = vmatprep.subr.mxu0 0.0
    %403 = vmatpush1.msra.mxu0 0.0
    %404 = vmatprep.subr.mxu0 0.0
    %405 = vmatpush1.msra.mxu0 0.0
    %406 = vmatprep.subr.mxu0 0.0
    %407 = vmatpush1.msra.mxu0 0.0
    %408 = vmatprep.subr.mxu0 0.0
    %409 = vmatpush1.msra.mxu0 0.0
    %410 = vmatprep.subr.mxu0 0.0
    %411 = vmatpush1.msra.mxu0 0.0
    %412 = vmatprep.subr.mxu0 0.0
    %413 = vmatpush1.msra.mxu0 0.0
    %414 = vmatprep.subr.mxu0 0.0
    %415 = vmatpush1.msra.mxu0 0.0
    %416 = vmatprep.subr.mxu0 0.0
    %417 = vmatpush1.msra.mxu0 0.0
    %418 = vmatprep.subr.mxu0 0.0
    %419 = vmatpush1.msra.mxu0 0.0
    %420 = vmatprep.subr.mxu0 0.0
    %421 = vmatpush1.msra.mxu0 0.0
    %422 = vmatprep.subr.mxu0 0.0
    %423 = vmatpush1.msra.mxu0 0.0
    %424 = vmatprep.subr.mxu0 0.0
    %425 = vmatpush1.msra.mxu0 0.0
    %426 = vmatprep.subr.mxu0 0.0
    %427 = vmatpush1.msra.mxu0 0.0
    %428 = vmatprep.subr.mxu0 0.0
    %429 = vmatpush1.msra.mxu0 0.0
    %430 = vmatprep.subr.mxu0 0.0
    %431 = vmatpush1.msra.mxu0 0.0
    %432 = vmatprep.subr.mxu0 0.0
    %433 = vmatpush1.msra.mxu0 0.0
    %434 = vmatprep.subr.mxu0 0.0
    %435 = vmatpush1.msra.mxu0 0.0
    %436 = vmatprep.subr.mxu0 0.0
    %437 = vmatpush1.msra.mxu0 0.0
    %438 = vmatprep.subr.mxu0 0.0
    %439 = vmatpush1.msra.mxu0 0.0
    %440 = vmatprep.subr.mxu0 0.0
    %441 = vmatpush1.msra.mxu0 0.0
    %442 = vmatprep.subr.mxu0 0.0
    %443 = vmatpush1.msra.mxu0 0.0
    %444 = vmatprep.subr.mxu0 0.0
    %445 = vmatpush1.msra.mxu0 0.0
    %446 = vmatprep.subr.mxu0 0.0
    %447 = vmatpush1.msra.mxu0 0.0
    %448 = vmatprep.subr.mxu0 0.0
    %449 = vmatpush1.msra.mxu0 0.0
    %450 = vmatprep.subr.mxu0 0.0
    %451 = vmatpush1.msra.mxu0 0.0
    %452 = vmatprep.subr.mxu0 0.0
    %453 = vmatpush1.msra.mxu0 0.0
    %454 = vmatprep.subr.mxu0 0.0
    %455 = vmatpush1.msra.mxu0 0.0
    %456 = vmatprep.subr.mxu0 0.0
    %457 = vmatpush1.msra.mxu0 0.0
    %458 = vmatprep.subr.mxu0 0.0
    %459 = vmatpush1.msra.mxu0 0.0
    %460 = vmatprep.mubr.f32.mxu0 0.0
    %461 = vmatmul.mubr.f32.gmra.mrb[0].mxu0 %v293
    %v462 = vpop.f32.mrb[0].mxu0
    %v463 = vadd.f32 %v375, %v462
    %v464 = vpop.f32.mrb[0].mxu0
    %465 = vmatprep.mubr.f32.mxu0 0.0
    %466 = vmatmul.mubr.f32.gmra.mrb[0].mxu0 %v296
    %v467 = vpop.f32.mrb[0].mxu0
    %v468 = vadd.f32 %v380, %v467
    %v469 = vpop.f32.mrb[0].mxu0
    %470 = vmatprep.mubr.f32.mxu0 0.0
    %471 = vmatmul.mubr.f32.gmra.mrb[0].mxu0 %v299
    %v472 = vpop.f32.mrb[0].mxu0
    %v473 = vadd.f32 %v385, %v472
    %v474 = vpop.f32.mrb[0].mxu0
    %475 = vmatprep.mubr.f32.mxu0 0.0
    %476 = vmatmul.mubr.f32.gmra.mrb[0].mxu0 %v302
    %v477 = vpop.f32.mrb[0].mxu0
    %v478 = vadd.f32 %v390, %v477
    %v479 = vpop.f32.mrb[0].mxu0
    %480 = vdwg.mxu0
    %v481 = vlaneseq
    %v482 = vand.u32 %v481, 127
    %vm483 = vcmp.eq.s32.totalorder %v31, %v482
    %vm484 = vcmp.eq.s32.totalorder %v32, %v482
    %vm485 = vcmp.eq.s32.totalorder %v33, %v482
    %vm486 = vcmp.eq.s32.totalorder %v266, %v482
    %v487 = vsel %vm483, %v463, 0.0
    %v488 = vsel %vm484, %v468, 0.0
    %v489 = vsel %vm485, %v473, 0.0
    %v490 = vsel %vm486, %v478, 0.0
    %v491 = vsel %vm50, %v487, 0.0
    %v492 = vsel %vm50, %v488, 0.0
    %v493 = vadd.f32 %v491, %v492
    %v494 = vsel %vm50, %v489, 0.0
    %v495 = vadd.f32 %v493, %v494
    %v496 = vsel %vm50, %v490, 0.0
    %v497 = vadd.f32 %v495, %v496
    %498 = vadd.xlane.f32.xlu0 %v497
    %v499 = vpop.xlane.xlu0 %498
    %v500 = vrot.slane %v499, 4
    %v501 = vadd.f32 %v499, %v500
    %v502 = vrot.slane %v501, 2
    %v503 = vadd.f32 %v501, %v502
    %v504 = vrot.slane %v503, 1
    %v505 = vadd.f32 %v503, %v504
    %s506 = vtos %v505
    %v507 = vstv %s506
    %v508 = vsel %vm38, %v262, 0.0
    %v509 = vsel %vm39, %v263, 0.0
    %v510 = vsel %vm40, %v264, 0.0
    %vm511 = vcmask 7168
    %v512 = vsel %vm511, %v508, 0.0
    %v513 = vsel %vm511, %v509, 0.0
    %v514 = vadd.f32 %v512, %v513
    %vm515 = vcmask 3072
    %v516 = vsel %vm515, %v510, 0.0
    %v517 = vadd.f32 %v514, %v516
    %518 = vadd.xlane.f32.xlu0 %v517
    %v519 = vpop.xlane.xlu0 %518
    %v520 = vrot.slane %v519, 4
    %v521 = vadd.f32 %v519, %v520
    %v522 = vrot.slane %v521, 2
    %v523 = vadd.f32 %v521, %v522
    %v524 = vrot.slane %v523, 1
    %v525 = vadd.f32 %v523, %v524
    %s526 = vtos %v525
    %v527 = vstv %s526
    %v528 = vsub.f32 %v527, %v507
    %vm529 = vcmask 0
    %530 = vst.msk [vmem:[#allocation5] sm:$0x1] %vm529, %v528
    // Predicated region
    $region14: #{tpu_custom_call.1} parent=1 // pred_check
      _
    $region15: #{tpu_custom_call.1} parent=1 // pred_check_branch
      %532 = sbr.rel (0) target = $region17
    $region16: #{tpu_custom_call.1} parent=1 // pred_region
      %s534 = ssub.s32 16, 16
      %535 = vsyncadd [#allocation4], %s534
      %s537 = sshll.u32 [#allocation5], 4
      %s538 = int_to_ptr.vmem [resolvable:$true] %s537
      %540 = dma.vmem_to_hbm [thread:$0]  %s538, 16, %s2, [#allocation4]
    $region17: #{tpu_custom_call.1} parent=1 // pred_fallthru
      _
    // Predicated region
    $region18: #{tpu_custom_call.1} parent=1 // pred_check
      _
    $region19: #{tpu_custom_call.1} parent=1 // pred_check_branch
      %542 = sbr.rel (0) target = $region21
    $region20: #{tpu_custom_call.1} parent=1 // pred_region
      %543 = dma.done [#allocation4], 16
    $region21: #{tpu_custom_call.1} parent=1 // pred_fallthru
      _
    %544 = vsyncpa [#allocation3], 1
    %545 = vsyncpa [#allocation4], 1

</llo_original>
